<compile_context>
chip_gen: v6e
topology: v6e:2x2x1
jax: 0.10.0
libtpu: 0.0.40
codegen_flags: <defaults>
</compile_context>

<pallas_src>
import jax
import jax.numpy as jnp
from jax.experimental import pallas as pl
from jax.experimental.pallas import tpu as pltpu


def label_scorer_kernel(heads_ref, deps_ref, wmh_ref, bmh_ref, wmd_ref, bmd_ref,
                        w2_ref, whd_ref, b_ref, out_ref):
    # Stage 1: MLP (nn.Linear) projections.  Operands may be bf16 (fast MXU
    # path on v6e/v7x); accumulation is f32, biases are f32.
    h = jnp.dot(heads_ref[...], wmh_ref[...],
                preferred_element_type=jnp.float32) + bmh_ref[...]      # [tb, D] f32
    d = jnp.dot(deps_ref[...], wmd_ref[...],
                preferred_element_type=jnp.float32) + bmd_ref[...]      # [tb, D] f32

    mxu_dtype = w2_ref.dtype            # bf16 (or f32 if use_bf16=False)
    h_c = h.astype(mxu_dtype)
    d_c = d.astype(mxu_dtype)

    # Stage 2a: fused head/dep linear scores: [tb, 2D] @ [2D, T] -> [tb, T].
    lin = jnp.dot(jnp.concatenate([h_c, d_c], axis=-1), whd_ref[...],
                  preferred_element_type=jnp.float32)

    # Stage 2b: fused biaffine.  W2[i, t*D + j] == W[t, i, j], therefore
    #   v[b, t*D + j] = sum_i d[b, i] * W[t, i, j]
    #   arc[b, t]     = sum_j v[b, t, j] * h[b, j]
    tb, T = out_ref.shape
    D = h.shape[-1]
    v = jnp.dot(d_c, w2_ref[...], preferred_element_type=jnp.float32)   # [tb, T*D] f32
    v = v.reshape(tb, T, D)
    arc = jnp.sum(v * h[:, None, :], axis=-1)                           # [tb, T] f32

    out_ref[...] = arc + lin + b_ref[...]


def label_scorer(heads, deps, params, *, use_bf16=True):
    """Biaffine label scorer.  heads/deps: [B, E] float32."""
    B, E = heads.shape
    D = params["Wh"].shape[0]
    T = params["b"].shape[-1]

    # ---- Host/XLA-side weight prep (off the kernel critical path) ----
    # W2[i, t*D + j] = W[t, i, j]  -> single [D, T*D] biaffine matmul operand.
    W2 = jnp.transpose(params["W"], (1, 0, 2)).reshape(D, T * D)
    # Whd = [Wh; Wd]  -> single [2D, T] linear-score matmul operand.
    Whd = jnp.concatenate([params["Wh"], params["Wd"]], axis=0)

    mxu_dtype = jnp.bfloat16 if use_bf16 else jnp.float32
    heads_c = heads.astype(mxu_dtype)
    deps_c = deps.astype(mxu_dtype)
    wmh = params["wmh"].astype(mxu_dtype)
    wmd = params["wmd"].astype(mxu_dtype)
    W2 = W2.astype(mxu_dtype)
    Whd = Whd.astype(mxu_dtype)
    bmh, bmd, b = params["bmh"], params["bmd"], params["b"]   # stay f32

    # ---- Row-block size: biggest power-of-two row block that divides B ----
    tb = B
    for cand in (512, 256, 128, 64, 32, 16, 8):
        if B % cand == 0:
            tb = cand
            break
    grid = (B // tb,)

    def row_spec(shape):
        return pl.BlockSpec(shape, lambda i: (i, 0))

    def rep_spec(shape):
        return pl.BlockSpec(shape, lambda i: (0, 0))

    return pl.pallas_call(
        label_scorer_kernel,
        out_shape=jax.ShapeDtypeStruct((B, T), jnp.float32),
        grid_spec=pltpu.PrefetchScalarGridSpec(
            num_scalar_prefetch=0,
            grid=grid,
            in_specs=[
                row_spec((tb, E)),        # heads
                row_spec((tb, E)),        # deps
                rep_spec((E, D)),         # wmh
                rep_spec((1, D)),         # bmh
                rep_spec((E, D)),         # wmd
                rep_spec((1, D)),         # bmd
                rep_spec((D, T * D)),     # W2 (fused biaffine weight)
                rep_spec((2 * D, T)),     # Whd (fused head/dep linear weight)
                rep_spec((1, T)),         # b
            ],
            out_specs=row_spec((tb, T)),
        ),
        compiler_params=pltpu.CompilerParams(
            dimension_semantics=("parallel",)),
    )(heads_c, deps_c, wmh, bmh, wmd, bmd, W2, Whd, b)


def label_scorer_reference(heads, deps, p, compute_dtype=jnp.float32):
    """Pure-JAX reference.  compute_dtype=bf16 mirrors the kernel's MXU
    operand precision (f32 accumulation either way)."""
    c = lambda x: x.astype(compute_dtype)
    h = jnp.dot(c(heads), c(p["wmh"]), preferred_element_type=jnp.float32) + p["bmh"]
    d = jnp.dot(c(deps), c(p["wmd"]), preferred_element_type=jnp.float32) + p["bmd"]
    head_s = jnp.dot(c(h), c(p["Wh"]), preferred_element_type=jnp.float32)
    dep_s = jnp.dot(c(d), c(p["Wd"]), preferred_element_type=jnp.float32)
    v = jnp.einsum("bi,tij->btj", c(d), c(p["W"]),
                   preferred_element_type=jnp.float32)
    arc = jnp.sum(v * h[:, None, :], axis=-1)
    return arc + head_s + dep_s + p["b"]


def init_params(key, input_dim, intermediate_dim, num_tags):
    """Deterministic synthetic parameter init (xavier-uniform-style bounds)."""
    E, D, T = input_dim, intermediate_dim, num_tags
    ks = jax.random.split(key, 8)

    def xavier(k, shape, fan_in, fan_out):
        bound = (6.0 / (fan_in + fan_out)) ** 0.5
        return jax.random.uniform(k, shape, jnp.float32, -bound, bound)

    return {
        # nn.Linear(input_dim, intermediate_dim), weights stored as [E, D]
        "wmh": xavier(ks[0], (E, D), E, D),
        "bmh": xavier(ks[1], (1, D), E, D),
        "wmd": xavier(ks[2], (E, D), E, D),
        "bmd": xavier(ks[3], (1, D), E, D),
        # Biaffine W: [T, D, D]
        "W": xavier(ks[4], (T, D, D), D * D, T * D),
        # Wh, Wd: [D, T]
        "Wh": xavier(ks[5], (D, T), D, T),
        "Wd": xavier(ks[6], (D, T), D, T),
        # b: [1, T]
        "b": jax.random.normal(ks[7], (1, T), jnp.float32),
    }


# TODO(synk): the `use_pretrained_embeddings=True` branch (multi-layer MLP
# with dropout) is not translated; the default nn.Linear branch is.

if __name__ == "__main__":
    # Small shapes consistent with the module (scaled-down input_dim).
    B, E, D, T = 8, 256, 128, 8

    key = jax.random.PRNGKey(0)
    k_h, k_d, k_p = jax.random.split(key, 3)
    heads = jax.random.normal(k_h, (B, E), jnp.float32)
    deps = jax.random.normal(k_d, (B, E), jnp.float32)
    params = init_params(k_p, E, D, T)

    out = label_scorer(heads, deps, params)
    out = jax.block_until_ready(out)
    assert out.shape == (B, T), out.shape

    # Tight check against a precision-matched (bf16-operand) reference.
    ref_bf16 = label_scorer_reference(heads, deps, params, jnp.bfloat16)
    assert jnp.allclose(out, ref_bf16, rtol=1e-3, atol=1e-2), \
        "mismatch vs bf16-matched reference"

    # Loose sanity check against the full-f32 reference.
    ref_f32 = label_scorer_reference(heads, deps, params, jnp.float32)
    assert jnp.allclose(out, ref_f32, rtol=5e-2, atol=1e-1), \
        "mismatch vs f32 reference"

    print("KERNEL_OK")
</pallas_src>

<mosaic_0001>
module attributes {stable_mosaic.version = 11 : i64} {
  func.func @label_scorer_kernel(%arg0: i32, %arg1: memref<8x256xbf16, #tpu.memory_space<vmem>>, %arg2: memref<8x256xbf16, #tpu.memory_space<vmem>>, %arg3: memref<256x128xbf16, #tpu.memory_space<vmem>>, %arg4: memref<1x128xf32, #tpu.memory_space<vmem>>, %arg5: memref<256x128xbf16, #tpu.memory_space<vmem>>, %arg6: memref<1x128xf32, #tpu.memory_space<vmem>>, %arg7: memref<128x1024xbf16, #tpu.memory_space<vmem>>, %arg8: memref<256x8xbf16, #tpu.memory_space<vmem>>, %arg9: memref<1x8xf32, #tpu.memory_space<vmem>>, %arg10: memref<8x8xf32, #tpu.memory_space<vmem>>) attributes {dimension_semantics = [#tpu.dimension_semantics<parallel>], iteration_bounds = array<i64: 1>, scalar_prefetch = 0 : i64, scratch_operands = 0 : i64, tpu.core_type = #tpu.core_type<tc>, window_params = [{transform_indices = @transform_0, window_bounds = array<i64: 8, 256>}, {transform_indices = @transform_1, window_bounds = array<i64: 8, 256>}, {pipeline_mode = #tpu.pipeline_mode<synchronous>, transform_indices = @transform_2, window_bounds = array<i64: 256, 128>}, {pipeline_mode = #tpu.pipeline_mode<synchronous>, transform_indices = @transform_3, window_bounds = array<i64: 1, 128>}, {pipeline_mode = #tpu.pipeline_mode<synchronous>, transform_indices = @transform_4, window_bounds = array<i64: 256, 128>}, {pipeline_mode = #tpu.pipeline_mode<synchronous>, transform_indices = @transform_5, window_bounds = array<i64: 1, 128>}, {pipeline_mode = #tpu.pipeline_mode<synchronous>, transform_indices = @transform_6, window_bounds = array<i64: 128, 1024>}, {pipeline_mode = #tpu.pipeline_mode<synchronous>, transform_indices = @transform_7, window_bounds = array<i64: 256, 8>}, {pipeline_mode = #tpu.pipeline_mode<synchronous>, transform_indices = @transform_8, window_bounds = array<i64: 1, 8>}, {transform_indices = @transform_9, window_bounds = array<i64: 8, 8>}]} {
    %c0 = arith.constant 0 : index
    %c0_0 = arith.constant 0 : index
    %0 = vector.load %arg1[%c0, %c0_0] : memref<8x256xbf16, #tpu.memory_space<vmem>>, vector<8x256xbf16>
    %c0_1 = arith.constant 0 : index
    %c0_2 = arith.constant 0 : index
    %1 = vector.load %arg3[%c0_1, %c0_2] : memref<256x128xbf16, #tpu.memory_space<vmem>>, vector<256x128xbf16>
    %cst = arith.constant dense<0.000000e+00> : vector<8x128xf32>
    %2 = tpu.matmul %0, %1, %cst {dimension_numbers = #tpu.dot_dimension_numbers<[1], [0], [0], [1], [0, 0, 1, 1], [], []>} : vector<8x256xbf16>, vector<256x128xbf16>, vector<8x128xf32> -> vector<8x128xf32>
    %c0_3 = arith.constant 0 : index
    %c0_4 = arith.constant 0 : index
    %3 = vector.load %arg4[%c0_3, %c0_4] : memref<1x128xf32, #tpu.memory_space<vmem>>, vector<1x128xf32>
    %4 = vector.broadcast %3 : vector<1x128xf32> to vector<8x128xf32>
    %5 = arith.addf %2, %4 : vector<8x128xf32>
    %c0_5 = arith.constant 0 : index
    %c0_6 = arith.constant 0 : index
    %6 = vector.load %arg2[%c0_5, %c0_6] : memref<8x256xbf16, #tpu.memory_space<vmem>>, vector<8x256xbf16>
    %c0_7 = arith.constant 0 : index
    %c0_8 = arith.constant 0 : index
    %7 = vector.load %arg5[%c0_7, %c0_8] : memref<256x128xbf16, #tpu.memory_space<vmem>>, vector<256x128xbf16>
    %cst_9 = arith.constant dense<0.000000e+00> : vector<8x128xf32>
    %8 = tpu.matmul %6, %7, %cst_9 {dimension_numbers = #tpu.dot_dimension_numbers<[1], [0], [0], [1], [0, 0, 1, 1], [], []>} : vector<8x256xbf16>, vector<256x128xbf16>, vector<8x128xf32> -> vector<8x128xf32>
    %c0_10 = arith.constant 0 : index
    %c0_11 = arith.constant 0 : index
    %9 = vector.load %arg6[%c0_10, %c0_11] : memref<1x128xf32, #tpu.memory_space<vmem>>, vector<1x128xf32>
    %10 = vector.broadcast %9 : vector<1x128xf32> to vector<8x128xf32>
    %11 = arith.addf %8, %10 : vector<8x128xf32>
    %12 = arith.truncf %5 : vector<8x128xf32> to vector<8x128xbf16>
    %13 = arith.truncf %11 : vector<8x128xf32> to vector<8x128xbf16>
    %14 = tpu.concatenate %12, %13 in 1 : vector<8x128xbf16>, vector<8x128xbf16> -> vector<8x256xbf16>
    %c0_12 = arith.constant 0 : index
    %c0_13 = arith.constant 0 : index
    %15 = vector.load %arg8[%c0_12, %c0_13] : memref<256x8xbf16, #tpu.memory_space<vmem>>, vector<256x8xbf16>
    %cst_14 = arith.constant dense<0.000000e+00> : vector<8x8xf32>
    %16 = tpu.matmul %14, %15, %cst_14 {dimension_numbers = #tpu.dot_dimension_numbers<[1], [0], [0], [1], [0, 0, 1, 1], [], []>} : vector<8x256xbf16>, vector<256x8xbf16>, vector<8x8xf32> -> vector<8x8xf32>
    %c0_15 = arith.constant 0 : index
    %c0_16 = arith.constant 0 : index
    %17 = vector.load %arg7[%c0_15, %c0_16] : memref<128x1024xbf16, #tpu.memory_space<vmem>>, vector<128x1024xbf16>
    %cst_17 = arith.constant dense<0.000000e+00> : vector<8x1024xf32>
    %18 = tpu.matmul %13, %17, %cst_17 {dimension_numbers = #tpu.dot_dimension_numbers<[1], [0], [0], [1], [0, 0, 1, 1], [], []>} : vector<8x128xbf16>, vector<128x1024xbf16>, vector<8x1024xf32> -> vector<8x1024xf32>
    %19 = vector.shape_cast %18 : vector<8x1024xf32> to vector<8x8x128xf32>
    %20 = vector.shape_cast %5 : vector<8x128xf32> to vector<8x1x128xf32>
    %21 = vector.broadcast %20 : vector<8x1x128xf32> to vector<8x8x128xf32>
    %22 = arith.mulf %19, %21 : vector<8x8x128xf32>
    %cst_18 = arith.constant dense<0.000000e+00> : vector<8x8xf32>
    %23 = vector.multi_reduction <add>, %22, %cst_18 [2] : vector<8x8x128xf32> to vector<8x8xf32>
    %24 = arith.addf %23, %16 : vector<8x8xf32>
    %c0_19 = arith.constant 0 : index
    %c0_20 = arith.constant 0 : index
    %25 = vector.load %arg9[%c0_19, %c0_20] : memref<1x8xf32, #tpu.memory_space<vmem>>, vector<1x8xf32>
    %26 = vector.broadcast %25 : vector<1x8xf32> to vector<8x8xf32>
    %27 = arith.addf %24, %26 : vector<8x8xf32>
    %c0_21 = arith.constant 0 : index
    %c0_22 = arith.constant 0 : index
    %28 = vector.load %arg10[%c0_21, %c0_22] : memref<8x8xf32, #tpu.memory_space<vmem>>, vector<8x8xf32>
    tpu.vector_store %arg10[%c0_21, %c0_22], %27 {strides = array<i32>} : memref<8x8xf32, #tpu.memory_space<vmem>>, vector<8x8xf32>,
    return
  }
  func.func @transform_0(%arg0: i32) -> (i32, i32) {
    %c0_i32 = arith.constant 0 : i32
    %c0_i32_0 = arith.constant 0 : i32
    return %arg0, %c0_i32 : i32, i32
  }
  func.func @transform_1(%arg0: i32) -> (i32, i32) {
    %c0_i32 = arith.constant 0 : i32
    %c0_i32_0 = arith.constant 0 : i32
    return %arg0, %c0_i32 : i32, i32
  }
  func.func @transform_2(%arg0: i32) -> (i32, i32) {
    %c0_i32 = arith.constant 0 : i32
    %c0_i32_0 = arith.constant 0 : i32
    %c0_i32_1 = arith.constant 0 : i32
    return %c0_i32, %c0_i32_0 : i32, i32
  }
  func.func @transform_3(%arg0: i32) -> (i32, i32) {
    %c0_i32 = arith.constant 0 : i32
    %c0_i32_0 = arith.constant 0 : i32
    %c0_i32_1 = arith.constant 0 : i32
    return %c0_i32, %c0_i32_0 : i32, i32
  }
  func.func @transform_4(%arg0: i32) -> (i32, i32) {
    %c0_i32 = arith.constant 0 : i32
    %c0_i32_0 = arith.constant 0 : i32
    %c0_i32_1 = arith.constant 0 : i32
    return %c0_i32, %c0_i32_0 : i32, i32
  }
  func.func @transform_5(%arg0: i32) -> (i32, i32) {
    %c0_i32 = arith.constant 0 : i32
    %c0_i32_0 = arith.constant 0 : i32
    %c0_i32_1 = arith.constant 0 : i32
    return %c0_i32, %c0_i32_0 : i32, i32
  }
  func.func @transform_6(%arg0: i32) -> (i32, i32) {
    %c0_i32 = arith.constant 0 : i32
    %c0_i32_0 = arith.constant 0 : i32
    %c0_i32_1 = arith.constant 0 : i32
    return %c0_i32, %c0_i32_0 : i32, i32
  }
  func.func @transform_7(%arg0: i32) -> (i32, i32) {
    %c0_i32 = arith.constant 0 : i32
    %c0_i32_0 = arith.constant 0 : i32
    %c0_i32_1 = arith.constant 0 : i32
    return %c0_i32, %c0_i32_0 : i32, i32
  }
  func.func @transform_8(%arg0: i32) -> (i32, i32) {
    %c0_i32 = arith.constant 0 : i32
    %c0_i32_0 = arith.constant 0 : i32
    %c0_i32_1 = arith.constant 0 : i32
    return %c0_i32, %c0_i32_0 : i32, i32
  }
  func.func @transform_9(%arg0: i32) -> (i32, i32) {
    %c0_i32 = arith.constant 0 : i32
    %c0_i32_0 = arith.constant 0 : i32
    return %arg0, %c0_i32 : i32, i32
  }
}

</mosaic_0001>

<llo_original>
// kernel: tpu_custom_call.1
$region0: #{tpu_custom_call.1}
  #allocation0 [shape = 'u32[]', space=smem, size = 0x4, offset = 0x4, fixed_abs, tag = 'smem constant byte address 0x4 - core index']
  #allocation1 [shape = 'u32[144,128]{1,0:T(1,128)}', space=vmem, size = 0x12000, scoped, tag = 'internal scratch']
  %s0 = inlined_call_operand.vmem [shape: bf16[8,256], index: 0, kind: input, shape index: {}]
  %s1 = inlined_call_operand.hbm [shape: bf16[8,256], index: 1, kind: input, shape index: {}]
  %s2 = inlined_call_operand.vmem [shape: bf16[256,128], index: 2, kind: input, shape index: {}]
  %s3 = inlined_call_operand.vmem [shape: f32[1,128], index: 3, kind: input, shape index: {}]
  %s4 = inlined_call_operand.hbm [shape: bf16[256,128], index: 4, kind: input, shape index: {}]
  %s5 = inlined_call_operand.vmem [shape: f32[1,128], index: 5, kind: input, shape index: {}]
  %s6 = inlined_call_operand.hbm [shape: bf16[128,1024], index: 6, kind: input, shape index: {}]
  %s7 = inlined_call_operand.vmem [shape: bf16[256,8], index: 7, kind: input, shape index: {}]
  %s8 = inlined_call_operand.vmem [shape: f32[1,8], index: 8, kind: input, shape index: {}]
  %s9 = inlined_call_operand.hbm [shape: f32[8,8], index: 9, kind: output, shape index: {}]
  %s10 = sld [smem:[#allocation0]]
  $region58: #{tpu_custom_call.1} parent=0
    _
  %s12 = ssub.s32 1, %s10
  %s13 = scalar_select 0, %s12, %s10
  $region1: #{tpu_custom_call.1} parent=0
    #allocation2 [shape = 'u8[4096]{0}', space=vmem, size = 0x1000, scoped, tag = 'input window, operand 1, single buffered']
    #allocation3 [shape = 's32[1]{0}', space=sflag, size = 0x4, scoped, tag = 'scoped memory for tpu_custom_call.1']
    #allocation4 [shape = 's32[1]{0}', space=sflag, size = 0x4, scoped, tag = 'scoped memory for tpu_custom_call.1']
    #allocation5 [shape = 'u8[65536]{0}', space=vmem, size = 0x10000, scoped, tag = 'input window, operand 4, single buffered']
    #allocation6 [shape = 's32[1]{0}', space=sflag, size = 0x4, scoped, tag = 'scoped memory for tpu_custom_call.1']
    #allocation7 [shape = 'u8[262144]{0}', space=vmem, size = 0x40000, scoped, tag = 'input window, operand 6, single buffered']
    #allocation8 [shape = 'u8[4096]{0}', space=vmem, size = 0x1000, scoped, tag = 'output window, operand 0, single buffered']
    %14 = vsyncpa [#allocation3], 0
    %15 = vsyncpa [#allocation6], 0
    %16 = vsyncpa [#allocation4], 0
    // Predicated region
    $region2: #{tpu_custom_call.1} parent=1 // pred_check
      _
    $region3: #{tpu_custom_call.1} parent=1 // pred_check_branch
      %18 = sbr.rel (0) target = $region5
    $region4: #{tpu_custom_call.1} parent=1 // pred_region
      _
    $region5: #{tpu_custom_call.1} parent=1 // pred_fallthru
      _
    // Predicated region
    $region6: #{tpu_custom_call.1} parent=1 // pred_check
      _
    $region7: #{tpu_custom_call.1} parent=1 // pred_check_branch
      %20 = sbr.rel (0) target = $region9
    $region8: #{tpu_custom_call.1} parent=1 // pred_region
      %s22 = ssub.s32 128, 128
      %23 = vsyncadd [#allocation3], %s22
      %s25 = sshll.u32 [#allocation2], 4
      %s26 = int_to_ptr.vmem [resolvable:$true] %s25
      %28 = dma.hbm_to_vmem [thread:$0]  %s1, 128, %s26, [#allocation3]
    $region9: #{tpu_custom_call.1} parent=1 // pred_fallthru
      _
    // Predicated region
    $region10: #{tpu_custom_call.1} parent=1 // pred_check
      _
    $region11: #{tpu_custom_call.1} parent=1 // pred_check_branch
      %30 = sbr.rel (0) target = $region13
    $region12: #{tpu_custom_call.1} parent=1 // pred_region
      _
    $region13: #{tpu_custom_call.1} parent=1 // pred_fallthru
      _
    // Predicated region
    $region14: #{tpu_custom_call.1} parent=1 // pred_check
      _
    $region15: #{tpu_custom_call.1} parent=1 // pred_check_branch
      %32 = sbr.rel (0) target = $region17
    $region16: #{tpu_custom_call.1} parent=1 // pred_region
      _
    $region17: #{tpu_custom_call.1} parent=1 // pred_fallthru
      _
    // Predicated region
    $region18: #{tpu_custom_call.1} parent=1 // pred_check
      _
    $region19: #{tpu_custom_call.1} parent=1 // pred_check_branch
      %34 = sbr.rel (0) target = $region21
    $region20: #{tpu_custom_call.1} parent=1 // pred_region
      %s36 = ssub.s32 2048, 2048
      %37 = vsyncadd [#allocation6], %s36
      %s38 = sshll.u32 [#allocation5], 4
      %s39 = int_to_ptr.vmem [resolvable:$true] %s38
      %44 = dma.hbm_to_vmem [thread:$0]  %s4, 2048, %s39, [#allocation6], 64, 64, 4
    $region21: #{tpu_custom_call.1} parent=1 // pred_fallthru
      _
    // Predicated region
    $region22: #{tpu_custom_call.1} parent=1 // pred_check
      _
    $region23: #{tpu_custom_call.1} parent=1 // pred_check_branch
      %46 = sbr.rel (0) target = $region25
    $region24: #{tpu_custom_call.1} parent=1 // pred_region
      _
    $region25: #{tpu_custom_call.1} parent=1 // pred_fallthru
      _
    // Predicated region
    $region26: #{tpu_custom_call.1} parent=1 // pred_check
      _
    $region27: #{tpu_custom_call.1} parent=1 // pred_check_branch
      %48 = sbr.rel (0) target = $region29
    $region28: #{tpu_custom_call.1} parent=1 // pred_region
      %s50 = ssub.s32 8192, 8192
      %51 = vsyncadd [#allocation6], %s50
      %s52 = sshll.u32 [#allocation7], 4
      %s53 = int_to_ptr.vmem [resolvable:$true] %s52
      %58 = dma.hbm_to_vmem [thread:$0]  %s6, 8192, %s53, [#allocation6], 512, 512, 32
    $region29: #{tpu_custom_call.1} parent=1 // pred_fallthru
      _
    // Predicated region
    $region30: #{tpu_custom_call.1} parent=1 // pred_check
      _
    $region31: #{tpu_custom_call.1} parent=1 // pred_check_branch
      %60 = sbr.rel (0) target = $region33
    $region32: #{tpu_custom_call.1} parent=1 // pred_region
      _
    $region33: #{tpu_custom_call.1} parent=1 // pred_fallthru
      _
    // Predicated region
    $region34: #{tpu_custom_call.1} parent=1 // pred_check
      _
    $region35: #{tpu_custom_call.1} parent=1 // pred_check_branch
      %62 = sbr.rel (0) target = $region37
    $region36: #{tpu_custom_call.1} parent=1 // pred_region
      _
    $region37: #{tpu_custom_call.1} parent=1 // pred_fallthru
      _
    // Predicated region
    $region38: #{tpu_custom_call.1} parent=1 // pred_check
      _
    $region39: #{tpu_custom_call.1} parent=1 // pred_check_branch
      %64 = sbr.rel (0) target = $region41
    $region40: #{tpu_custom_call.1} parent=1 // pred_region
      %65 = dma.done [#allocation3], 128
    $region41: #{tpu_custom_call.1} parent=1 // pred_fallthru
      _
    // Predicated region
    $region42: #{tpu_custom_call.1} parent=1 // pred_check
      _
    $region43: #{tpu_custom_call.1} parent=1 // pred_check_branch
      %67 = sbr.rel (0) target = $region45
    $region44: #{tpu_custom_call.1} parent=1 // pred_region
      %68 = dma.done [#allocation6], 2048
    $region45: #{tpu_custom_call.1} parent=1 // pred_fallthru
      _
    // Predicated region
    $region46: #{tpu_custom_call.1} parent=1 // pred_check
      _
    $region47: #{tpu_custom_call.1} parent=1 // pred_check_branch
      %70 = sbr.rel (0) target = $region49
    $region48: #{tpu_custom_call.1} parent=1 // pred_region
      %71 = dma.done [#allocation6], 8192
    $region49: #{tpu_custom_call.1} parent=1 // pred_fallthru
      _
    %v73 = vld [vmem:[%s0] sm:$0xff]
    %v74 = vld [vmem:[%s2] sm:$0xf]
    %v75 = vld [vmem:[%s2 + $0x4] sm:$0xf]
    %v76 = vld [vmem:[%s2 + $0x8] sm:$0xf]
    %v77 = vld [vmem:[%s2 + $0xc] sm:$0xf]
    %v78 = vld [vmem:[%s2 + $0x10] sm:$0xf]
    %v79 = vld [vmem:[%s2 + $0x14] sm:$0xf]
    %v80 = vld [vmem:[%s2 + $0x18] sm:$0xf]
    %v81 = vld [vmem:[%s2 + $0x1c] sm:$0xf]
    %v82 = vld [vmem:[%s2 + $0x20] sm:$0xf]
    %v83 = vld [vmem:[%s2 + $0x24] sm:$0xf]
    %v84 = vld [vmem:[%s2 + $0x28] sm:$0xf]
    %v85 = vld [vmem:[%s2 + $0x2c] sm:$0xf]
    %v86 = vld [vmem:[%s2 + $0x30] sm:$0xf]
    %v87 = vld [vmem:[%s2 + $0x34] sm:$0xf]
    %v88 = vld [vmem:[%s2 + $0x38] sm:$0xf]
    %v89 = vld [vmem:[%s2 + $0x3c] sm:$0xf]
    %v90 = vld [vmem:[%s2 + $0x40] sm:$0xf]
    %v91 = vld [vmem:[%s2 + $0x44] sm:$0xf]
    %v92 = vld [vmem:[%s2 + $0x48] sm:$0xf]
    %v93 = vld [vmem:[%s2 + $0x4c] sm:$0xf]
    %v94 = vld [vmem:[%s2 + $0x50] sm:$0xf]
    %v95 = vld [vmem:[%s2 + $0x54] sm:$0xf]
    %v96 = vld [vmem:[%s2 + $0x58] sm:$0xf]
    %v97 = vld [vmem:[%s2 + $0x5c] sm:$0xf]
    %v98 = vld [vmem:[%s2 + $0x60] sm:$0xf]
    %v99 = vld [vmem:[%s2 + $0x64] sm:$0xf]
    %v100 = vld [vmem:[%s2 + $0x68] sm:$0xf]
    %v101 = vld [vmem:[%s2 + $0x6c] sm:$0xf]
    %v102 = vld [vmem:[%s2 + $0x70] sm:$0xf]
    %v103 = vld [vmem:[%s2 + $0x74] sm:$0xf]
    %v104 = vld [vmem:[%s2 + $0x78] sm:$0xf]
    %v105 = vld [vmem:[%s2 + $0x7c] sm:$0xf]
    %v106 = vld [vmem:[%s3] sm:$0x1]
    %v108 = vlaneseq
    %v109 = vshrl.u32 %v108, 7
    %v110 = vsub.s32 0, %v109
    %v111 = vrot.slane %v106, %v110
    %v114 = vunpack.c.l.b16 %v73
    %v115 = vunpack.c.h.b16 %v73
    %v116 = vpack.c.b16 %v114, %v114
    %v117 = vpack.c.b16 %v115, %v115
    %v152 = vunpack.c.l.b16 %v74
    %v153 = vunpack.c.l.b16 %v75
    %v154 = vunpack.c.l.b16 %v76
    %v155 = vunpack.c.l.b16 %v77
    %v156 = vunpack.c.l.b16 %v78
    %v157 = vunpack.c.l.b16 %v79
    %v158 = vunpack.c.l.b16 %v80
    %v159 = vunpack.c.l.b16 %v81
    %v160 = vunpack.c.l.b16 %v82
    %v161 = vunpack.c.l.b16 %v83
    %v162 = vunpack.c.l.b16 %v84
    %v163 = vunpack.c.l.b16 %v85
    %v164 = vunpack.c.l.b16 %v86
    %v165 = vunpack.c.l.b16 %v87
    %v166 = vunpack.c.l.b16 %v88
    %v167 = vunpack.c.l.b16 %v89
    %v168 = vunpack.c.l.b16 %v90
    %v169 = vunpack.c.l.b16 %v91
    %v170 = vunpack.c.l.b16 %v92
    %v171 = vunpack.c.l.b16 %v93
    %v172 = vunpack.c.l.b16 %v94
    %v173 = vunpack.c.l.b16 %v95
    %v174 = vunpack.c.l.b16 %v96
    %v175 = vunpack.c.l.b16 %v97
    %v176 = vunpack.c.l.b16 %v98
    %v177 = vunpack.c.l.b16 %v99
    %v178 = vunpack.c.l.b16 %v100
    %v179 = vunpack.c.l.b16 %v101
    %v180 = vunpack.c.l.b16 %v102
    %v181 = vunpack.c.l.b16 %v103
    %v182 = vunpack.c.l.b16 %v104
    %v183 = vunpack.c.l.b16 %v105
    %v184 = vpack.c.b16 %v153, %v152
    %v185 = vpack.c.b16 %v155, %v154
    %v186 = vpack.c.b16 %v157, %v156
    %v187 = vpack.c.b16 %v159, %v158
    %v188 = vpack.c.b16 %v161, %v160
    %v189 = vpack.c.b16 %v163, %v162
    %v190 = vpack.c.b16 %v165, %v164
    %v191 = vpack.c.b16 %v167, %v166
    %v192 = vpack.c.b16 %v169, %v168
    %v193 = vpack.c.b16 %v171, %v170
    %v194 = vpack.c.b16 %v173, %v172
    %v195 = vpack.c.b16 %v175, %v174
    %v196 = vpack.c.b16 %v177, %v176
    %v197 = vpack.c.b16 %v179, %v178
    %v198 = vpack.c.b16 %v181, %v180
    %v199 = vpack.c.b16 %v183, %v182
    %216 = vmatprep.subr.bf16.mxu0 0
    %217 = vmatpush1.bf16.msra.mxu0 %v191
    %218 = vmatprep.subr.bf16.mxu0 0
    %219 = vmatpush1.bf16.msra.mxu0 %v190
    %220 = vmatprep.subr.bf16.mxu0 0
    %221 = vmatpush1.bf16.msra.mxu0 %v189
    %222 = vmatprep.subr.bf16.mxu0 0
    %223 = vmatpush1.bf16.msra.mxu0 %v188
    %224 = vmatprep.subr.bf16.mxu0 0
    %225 = vmatpush1.bf16.msra.mxu0 %v187
    %226 = vmatprep.subr.bf16.mxu0 0
    %227 = vmatpush1.bf16.msra.mxu0 %v186
    %228 = vmatprep.subr.bf16.mxu0 0
    %229 = vmatpush1.bf16.msra.mxu0 %v185
    %230 = vmatprep.subr.bf16.mxu0 0
    %231 = vmatpush1.bf16.msra.mxu0 %v184
    %232 = vmatprep.subr.bf16.mxu0 0
    %233 = vmatpush2.bf16.msra.mxu0 %v199
    %234 = vmatprep.subr.bf16.mxu0 0
    %235 = vmatpush2.bf16.msra.mxu0 %v198
    %236 = vmatprep.subr.bf16.mxu0 0
    %237 = vmatpush2.bf16.msra.mxu0 %v197
    %238 = vmatprep.subr.bf16.mxu0 0
    %239 = vmatpush2.bf16.msra.mxu0 %v196
    %240 = vmatprep.subr.bf16.mxu0 0
    %241 = vmatpush2.bf16.msra.mxu0 %v195
    %242 = vmatprep.subr.bf16.mxu0 0
    %243 = vmatpush2.bf16.msra.mxu0 %v194
    %244 = vmatprep.subr.bf16.mxu0 0
    %245 = vmatpush2.bf16.msra.mxu0 %v193
    %246 = vmatprep.subr.bf16.mxu0 0
    %247 = vmatpush2.bf16.msra.mxu0 %v192
    %248 = vmatprep.mubr.bf16.mxu0 %v117
    %249 = vmatmul.mubr.bf16.gmra.mxu0 %v116
    %v250 = vpop.f32.mrf.mxu0
    %v251 = vadd.f32 %v111, %v250
    %v252 = vpop.f32.mrf.mxu0
    %v253 = vpop.f32.mrf.mxu0
    %v254 = vpop.f32.mrf.mxu0
    %255 = vdwg.mxu0
    %v256 = vld [vmem:[#allocation2] sm:$0xff]
    %v257 = vld [vmem:[#allocation5] sm:$0xf]
    %v258 = vld [vmem:[#allocation5 + $0x4] sm:$0xf]
    %v259 = vld [vmem:[#allocation5 + $0x8] sm:$0xf]
    %v260 = vld [vmem:[#allocation5 + $0xc] sm:$0xf]
    %v261 = vld [vmem:[#allocation5 + $0x10] sm:$0xf]
    %v262 = vld [vmem:[#allocation5 + $0x14] sm:$0xf]
    %v263 = vld [vmem:[#allocation5 + $0x18] sm:$0xf]
    %v264 = vld [vmem:[#allocation5 + $0x1c] sm:$0xf]
    %v265 = vld [vmem:[#allocation5 + $0x20] sm:$0xf]
    %v266 = vld [vmem:[#allocation5 + $0x24] sm:$0xf]
    %v267 = vld [vmem:[#allocation5 + $0x28] sm:$0xf]
    %v268 = vld [vmem:[#allocation5 + $0x2c] sm:$0xf]
    %v269 = vld [vmem:[#allocation5 + $0x30] sm:$0xf]
    %v270 = vld [vmem:[#allocation5 + $0x34] sm:$0xf]
    %v271 = vld [vmem:[#allocation5 + $0x38] sm:$0xf]
    %v272 = vld [vmem:[#allocation5 + $0x3c] sm:$0xf]
    %v273 = vld [vmem:[#allocation5 + $0x40] sm:$0xf]
    %v274 = vld [vmem:[#allocation5 + $0x44] sm:$0xf]
    %v275 = vld [vmem:[#allocation5 + $0x48] sm:$0xf]
    %v276 = vld [vmem:[#allocation5 + $0x4c] sm:$0xf]
    %v277 = vld [vmem:[#allocation5 + $0x50] sm:$0xf]
    %v278 = vld [vmem:[#allocation5 + $0x54] sm:$0xf]
    %v279 = vld [vmem:[#allocation5 + $0x58] sm:$0xf]
    %v280 = vld [vmem:[#allocation5 + $0x5c] sm:$0xf]
    %v281 = vld [vmem:[#allocation5 + $0x60] sm:$0xf]
    %v282 = vld [vmem:[#allocation5 + $0x64] sm:$0xf]
    %v283 = vld [vmem:[#allocation5 + $0x68] sm:$0xf]
    %v284 = vld [vmem:[#allocation5 + $0x6c] sm:$0xf]
    %v285 = vld [vmem:[#allocation5 + $0x70] sm:$0xf]
    %v286 = vld [vmem:[#allocation5 + $0x74] sm:$0xf]
    %v287 = vld [vmem:[#allocation5 + $0x78] sm:$0xf]
    %v288 = vld [vmem:[#allocation5 + $0x7c] sm:$0xf]
    %v289 = vld [vmem:[%s5] sm:$0x1]
    %v291 = vlaneseq
    %v292 = vshrl.u32 %v291, 7
    %v293 = vsub.s32 0, %v292
    %v294 = vrot.slane %v289, %v293
    %v297 = vunpack.c.l.b16 %v256
    %v298 = vunpack.c.h.b16 %v256
    %v299 = vpack.c.b16 %v297, %v297
    %v300 = vpack.c.b16 %v298, %v298
    %v335 = vunpack.c.l.b16 %v257
    %v336 = vunpack.c.l.b16 %v258
    %v337 = vunpack.c.l.b16 %v259
    %v338 = vunpack.c.l.b16 %v260
    %v339 = vunpack.c.l.b16 %v261
    %v340 = vunpack.c.l.b16 %v262
    %v341 = vunpack.c.l.b16 %v263
    %v342 = vunpack.c.l.b16 %v264
    %v343 = vunpack.c.l.b16 %v265
    %v344 = vunpack.c.l.b16 %v266
    %v345 = vunpack.c.l.b16 %v267
    %v346 = vunpack.c.l.b16 %v268
    %v347 = vunpack.c.l.b16 %v269
    %v348 = vunpack.c.l.b16 %v270
    %v349 = vunpack.c.l.b16 %v271
    %v350 = vunpack.c.l.b16 %v272
    %v351 = vunpack.c.l.b16 %v273
    %v352 = vunpack.c.l.b16 %v274
    %v353 = vunpack.c.l.b16 %v275
    %v354 = vunpack.c.l.b16 %v276
    %v355 = vunpack.c.l.b16 %v277
    %v356 = vunpack.c.l.b16 %v278
    %v357 = vunpack.c.l.b16 %v279
    %v358 = vunpack.c.l.b16 %v280
    %v359 = vunpack.c.l.b16 %v281
    %v360 = vunpack.c.l.b16 %v282
    %v361 = vunpack.c.l.b16 %v283
    %v362 = vunpack.c.l.b16 %v284
    %v363 = vunpack.c.l.b16 %v285
    %v364 = vunpack.c.l.b16 %v286
    %v365 = vunpack.c.l.b16 %v287
    %v366 = vunpack.c.l.b16 %v288
    %v367 = vpack.c.b16 %v336, %v335
    %v368 = vpack.c.b16 %v338, %v337
    %v369 = vpack.c.b16 %v340, %v339
    %v370 = vpack.c.b16 %v342, %v341
    %v371 = vpack.c.b16 %v344, %v343
    %v372 = vpack.c.b16 %v346, %v345
    %v373 = vpack.c.b16 %v348, %v347
    %v374 = vpack.c.b16 %v350, %v349
    %v375 = vpack.c.b16 %v352, %v351
    %v376 = vpack.c.b16 %v354, %v353
    %v377 = vpack.c.b16 %v356, %v355
    %v378 = vpack.c.b16 %v358, %v357
    %v379 = vpack.c.b16 %v360, %v359
    %v380 = vpack.c.b16 %v362, %v361
    %v381 = vpack.c.b16 %v364, %v363
    %v382 = vpack.c.b16 %v366, %v365
    %399 = vmatprep.subr.bf16.mxu0 0
    %400 = vmatpush1.bf16.msra.mxu0 %v374
    %401 = vmatprep.subr.bf16.mxu0 0
    %402 = vmatpush1.bf16.msra.mxu0 %v373
    %403 = vmatprep.subr.bf16.mxu0 0
    %404 = vmatpush1.bf16.msra.mxu0 %v372
    %405 = vmatprep.subr.bf16.mxu0 0
    %406 = vmatpush1.bf16.msra.mxu0 %v371
    %407 = vmatprep.subr.bf16.mxu0 0
    %408 = vmatpush1.bf16.msra.mxu0 %v370
    %409 = vmatprep.subr.bf16.mxu0 0
    %410 = vmatpush1.bf16.msra.mxu0 %v369
    %411 = vmatprep.subr.bf16.mxu0 0
    %412 = vmatpush1.bf16.msra.mxu0 %v368
    %413 = vmatprep.subr.bf16.mxu0 0
    %414 = vmatpush1.bf16.msra.mxu0 %v367
    %415 = vmatprep.subr.bf16.mxu0 0
    %416 = vmatpush2.bf16.msra.mxu0 %v382
    %417 = vmatprep.subr.bf16.mxu0 0
    %418 = vmatpush2.bf16.msra.mxu0 %v381
    %419 = vmatprep.subr.bf16.mxu0 0
    %420 = vmatpush2.bf16.msra.mxu0 %v380
    %421 = vmatprep.subr.bf16.mxu0 0
    %422 = vmatpush2.bf16.msra.mxu0 %v379
    %423 = vmatprep.subr.bf16.mxu0 0
    %424 = vmatpush2.bf16.msra.mxu0 %v378
    %425 = vmatprep.subr.bf16.mxu0 0
    %426 = vmatpush2.bf16.msra.mxu0 %v377
    %427 = vmatprep.subr.bf16.mxu0 0
    %428 = vmatpush2.bf16.msra.mxu0 %v376
    %429 = vmatprep.subr.bf16.mxu0 0
    %430 = vmatpush2.bf16.msra.mxu0 %v375
    %431 = vmatprep.mubr.bf16.mxu0 %v300
    %432 = vmatmul.mubr.bf16.gmra.mxu0 %v299
    %v433 = vpop.f32.mrf.mxu0
    %v434 = vadd.f32 %v294, %v433
    %v435 = vpop.f32.mrf.mxu0
    %v436 = vpop.f32.mrf.mxu0
    %v437 = vpop.f32.mrf.mxu0
    %438 = vdwg.mxu0
    %v439 = vpack.c.bf16 %v251, %v251
    %v440 = vpack.c.bf16 %v434, %v434
    %v441 = vld [vmem:[%s7] sm:$0xf]
    %v442 = vld [vmem:[%s7 + $0x4] sm:$0xf]
    %v443 = vld [vmem:[%s7 + $0x8] sm:$0xf]
    %v444 = vld [vmem:[%s7 + $0xc] sm:$0xf]
    %v445 = vld [vmem:[%s7 + $0x10] sm:$0xf]
    %v446 = vld [vmem:[%s7 + $0x14] sm:$0xf]
    %v447 = vld [vmem:[%s7 + $0x18] sm:$0xf]
    %v448 = vld [vmem:[%s7 + $0x1c] sm:$0xf]
    %v449 = vld [vmem:[%s7 + $0x20] sm:$0xf]
    %v450 = vld [vmem:[%s7 + $0x24] sm:$0xf]
    %v451 = vld [vmem:[%s7 + $0x28] sm:$0xf]
    %v452 = vld [vmem:[%s7 + $0x2c] sm:$0xf]
    %v453 = vld [vmem:[%s7 + $0x30] sm:$0xf]
    %v454 = vld [vmem:[%s7 + $0x34] sm:$0xf]
    %v455 = vld [vmem:[%s7 + $0x38] sm:$0xf]
    %v456 = vld [vmem:[%s7 + $0x3c] sm:$0xf]
    %v457 = vld [vmem:[%s7 + $0x40] sm:$0xf]
    %v458 = vld [vmem:[%s7 + $0x44] sm:$0xf]
    %v459 = vld [vmem:[%s7 + $0x48] sm:$0xf]
    %v460 = vld [vmem:[%s7 + $0x4c] sm:$0xf]
    %v461 = vld [vmem:[%s7 + $0x50] sm:$0xf]
    %v462 = vld [vmem:[%s7 + $0x54] sm:$0xf]
    %v463 = vld [vmem:[%s7 + $0x58] sm:$0xf]
    %v464 = vld [vmem:[%s7 + $0x5c] sm:$0xf]
    %v465 = vld [vmem:[%s7 + $0x60] sm:$0xf]
    %v466 = vld [vmem:[%s7 + $0x64] sm:$0xf]
    %v467 = vld [vmem:[%s7 + $0x68] sm:$0xf]
    %v468 = vld [vmem:[%s7 + $0x6c] sm:$0xf]
    %v469 = vld [vmem:[%s7 + $0x70] sm:$0xf]
    %v470 = vld [vmem:[%s7 + $0x74] sm:$0xf]
    %v471 = vld [vmem:[%s7 + $0x78] sm:$0xf]
    %v472 = vld [vmem:[%s7 + $0x7c] sm:$0xf]
    %v505 = vunpack.c.l.b16 %v441
    %v506 = vunpack.c.l.b16 %v442
    %v507 = vunpack.c.l.b16 %v443
    %v508 = vunpack.c.l.b16 %v444
    %v509 = vunpack.c.l.b16 %v445
    %v510 = vunpack.c.l.b16 %v446
    %v511 = vunpack.c.l.b16 %v447
    %v512 = vunpack.c.l.b16 %v448
    %v513 = vunpack.c.l.b16 %v449
    %v514 = vunpack.c.l.b16 %v450
    %v515 = vunpack.c.l.b16 %v451
    %v516 = vunpack.c.l.b16 %v452
    %v517 = vunpack.c.l.b16 %v453
    %v518 = vunpack.c.l.b16 %v454
    %v519 = vunpack.c.l.b16 %v455
    %v520 = vunpack.c.l.b16 %v456
    %v521 = vunpack.c.l.b16 %v457
    %v522 = vunpack.c.l.b16 %v458
    %v523 = vunpack.c.l.b16 %v459
    %v524 = vunpack.c.l.b16 %v460
    %v525 = vunpack.c.l.b16 %v461
    %v526 = vunpack.c.l.b16 %v462
    %v527 = vunpack.c.l.b16 %v463
    %v528 = vunpack.c.l.b16 %v464
    %v529 = vunpack.c.l.b16 %v465
    %v530 = vunpack.c.l.b16 %v466
    %v531 = vunpack.c.l.b16 %v467
    %v532 = vunpack.c.l.b16 %v468
    %v533 = vunpack.c.l.b16 %v469
    %v534 = vunpack.c.l.b16 %v470
    %v535 = vunpack.c.l.b16 %v471
    %v536 = vunpack.c.l.b16 %v472
    %v537 = vpack.c.b16 %v506, %v505
    %v538 = vpack.c.b16 %v508, %v507
    %v539 = vpack.c.b16 %v510, %v509
    %v540 = vpack.c.b16 %v512, %v511
    %v541 = vpack.c.b16 %v514, %v513
    %v542 = vpack.c.b16 %v516, %v515
    %v543 = vpack.c.b16 %v518, %v517
    %v544 = vpack.c.b16 %v520, %v519
    %v545 = vpack.c.b16 %v522, %v521
    %v546 = vpack.c.b16 %v524, %v523
    %v547 = vpack.c.b16 %v526, %v525
    %v548 = vpack.c.b16 %v528, %v527
    %v549 = vpack.c.b16 %v530, %v529
    %v550 = vpack.c.b16 %v532, %v531
    %v551 = vpack.c.b16 %v534, %v533
    %v552 = vpack.c.b16 %v536, %v535
    %569 = vmatprep.subr.bf16.mxu0 0
    %570 = vmatpush1.bf16.msra.mxu0 %v544
    %571 = vmatprep.subr.bf16.mxu0 0
    %572 = vmatpush1.bf16.msra.mxu0 %v543
    %573 = vmatprep.subr.bf16.mxu0 0
    %574 = vmatpush1.bf16.msra.mxu0 %v542
    %575 = vmatprep.subr.bf16.mxu0 0
    %576 = vmatpush1.bf16.msra.mxu0 %v541
    %577 = vmatprep.subr.bf16.mxu0 0
    %578 = vmatpush1.bf16.msra.mxu0 %v540
    %579 = vmatprep.subr.bf16.mxu0 0
    %580 = vmatpush1.bf16.msra.mxu0 %v539
    %581 = vmatprep.subr.bf16.mxu0 0
    %582 = vmatpush1.bf16.msra.mxu0 %v538
    %583 = vmatprep.subr.bf16.mxu0 0
    %584 = vmatpush1.bf16.msra.mxu0 %v537
    %585 = vmatprep.subr.bf16.mxu0 0
    %586 = vmatpush2.bf16.msra.mxu0 %v552
    %587 = vmatprep.subr.bf16.mxu0 0
    %588 = vmatpush2.bf16.msra.mxu0 %v551
    %589 = vmatprep.subr.bf16.mxu0 0
    %590 = vmatpush2.bf16.msra.mxu0 %v550
    %591 = vmatprep.subr.bf16.mxu0 0
    %592 = vmatpush2.bf16.msra.mxu0 %v549
    %593 = vmatprep.subr.bf16.mxu0 0
    %594 = vmatpush2.bf16.msra.mxu0 %v548
    %595 = vmatprep.subr.bf16.mxu0 0
    %596 = vmatpush2.bf16.msra.mxu0 %v547
    %597 = vmatprep.subr.bf16.mxu0 0
    %598 = vmatpush2.bf16.msra.mxu0 %v546
    %599 = vmatprep.subr.bf16.mxu0 0
    %600 = vmatpush2.bf16.msra.mxu0 %v545
    %601 = vmatprep.mubr.bf16.mxu0 %v440
    %602 = vmatmul.mubr.bf16.gmra.mxu0 %v439
    %v603 = vpop.f32.mrf.mxu0
    %v604 = vadd.f32 0.0, %v603
    %v605 = vpop.f32.mrf.mxu0
    %v606 = vpop.f32.mrf.mxu0
    %v607 = vpop.f32.mrf.mxu0
    %608 = vdwg.mxu0
    %v609 = vld [vmem:[#allocation7] sm:$0xff]
    %v610 = vld [vmem:[#allocation7 + $0x8] sm:$0xff]
    %v611 = vld [vmem:[#allocation7 + $0x10] sm:$0xff]
    %v612 = vld [vmem:[#allocation7 + $0x18] sm:$0xff]
    %v613 = vld [vmem:[#allocation7 + $0x20] sm:$0xff]
    %v614 = vld [vmem:[#allocation7 + $0x28] sm:$0xff]
    %v615 = vld [vmem:[#allocation7 + $0x30] sm:$0xff]
    %v616 = vld [vmem:[#allocation7 + $0x38] sm:$0xff]
    %v617 = vld [vmem:[#allocation7 + $0x40] sm:$0xff]
    %v618 = vld [vmem:[#allocation7 + $0x48] sm:$0xff]
    %v619 = vld [vmem:[#allocation7 + $0x50] sm:$0xff]
    %v620 = vld [vmem:[#allocation7 + $0x58] sm:$0xff]
    %v621 = vld [vmem:[#allocation7 + $0x60] sm:$0xff]
    %v622 = vld [vmem:[#allocation7 + $0x68] sm:$0xff]
    %v623 = vld [vmem:[#allocation7 + $0x70] sm:$0xff]
    %v624 = vld [vmem:[#allocation7 + $0x78] sm:$0xff]
    %v625 = vld [vmem:[#allocation7 + $0x80] sm:$0xff]
    %v626 = vld [vmem:[#allocation7 + $0x88] sm:$0xff]
    %v627 = vld [vmem:[#allocation7 + $0x90] sm:$0xff]
    %v628 = vld [vmem:[#allocation7 + $0x98] sm:$0xff]
    %v629 = vld [vmem:[#allocation7 + $0xa0] sm:$0xff]
    %v630 = vld [vmem:[#allocation7 + $0xa8] sm:$0xff]
    %v631 = vld [vmem:[#allocation7 + $0xb0] sm:$0xff]
    %v632 = vld [vmem:[#allocation7 + $0xb8] sm:$0xff]
    %v633 = vld [vmem:[#allocation7 + $0xc0] sm:$0xff]
    %v634 = vld [vmem:[#allocation7 + $0xc8] sm:$0xff]
    %v635 = vld [vmem:[#allocation7 + $0xd0] sm:$0xff]
    %v636 = vld [vmem:[#allocation7 + $0xd8] sm:$0xff]
    %v637 = vld [vmem:[#allocation7 + $0xe0] sm:$0xff]
    %v638 = vld [vmem:[#allocation7 + $0xe8] sm:$0xff]
    %v639 = vld [vmem:[#allocation7 + $0xf0] sm:$0xff]
    %v640 = vld [vmem:[#allocation7 + $0xf8] sm:$0xff]
    %v641 = vld [vmem:[#allocation7 + $0x100] sm:$0xff]
    %v642 = vld [vmem:[#allocation7 + $0x108] sm:$0xff]
    %v643 = vld [vmem:[#allocation7 + $0x110] sm:$0xff]
    %v644 = vld [vmem:[#allocation7 + $0x118] sm:$0xff]
    %v645 = vld [vmem:[#allocation7 + $0x120] sm:$0xff]
    %v646 = vld [vmem:[#allocation7 + $0x128] sm:$0xff]
    %v647 = vld [vmem:[#allocation7 + $0x130] sm:$0xff]
    %v648 = vld [vmem:[#allocation7 + $0x138] sm:$0xff]
    %v649 = vld [vmem:[#allocation7 + $0x140] sm:$0xff]
    %v650 = vld [vmem:[#allocation7 + $0x148] sm:$0xff]
    %v651 = vld [vmem:[#allocation7 + $0x150] sm:$0xff]
    %v652 = vld [vmem:[#allocation7 + $0x158] sm:$0xff]
    %v653 = vld [vmem:[#allocation7 + $0x160] sm:$0xff]
    %v654 = vld [vmem:[#allocation7 + $0x168] sm:$0xff]
    %v655 = vld [vmem:[#allocation7 + $0x170] sm:$0xff]
    %v656 = vld [vmem:[#allocation7 + $0x178] sm:$0xff]
    %v657 = vld [vmem:[#allocation7 + $0x180] sm:$0xff]
    %v658 = vld [vmem:[#allocation7 + $0x188] sm:$0xff]
    %v659 = vld [vmem:[#allocation7 + $0x190] sm:$0xff]
    %v660 = vld [vmem:[#allocation7 + $0x198] sm:$0xff]
    %v661 = vld [vmem:[#allocation7 + $0x1a0] sm:$0xff]
    %v662 = vld [vmem:[#allocation7 + $0x1a8] sm:$0xff]
    %v663 = vld [vmem:[#allocation7 + $0x1b0] sm:$0xff]
    %v664 = vld [vmem:[#allocation7 + $0x1b8] sm:$0xff]
    %v665 = vld [vmem:[#allocation7 + $0x1c0] sm:$0xff]
    %v666 = vld [vmem:[#allocation7 + $0x1c8] sm:$0xff]
    %v667 = vld [vmem:[#allocation7 + $0x1d0] sm:$0xff]
    %v668 = vld [vmem:[#allocation7 + $0x1d8] sm:$0xff]
    %v669 = vld [vmem:[#allocation7 + $0x1e0] sm:$0xff]
    %v670 = vld [vmem:[#allocation7 + $0x1e8] sm:$0xff]
    %v671 = vld [vmem:[#allocation7 + $0x1f0] sm:$0xff]
    %v672 = vld [vmem:[#allocation7 + $0x1f8] sm:$0xff]
    %v737 = vunpack.c.l.b16 %v609
    %v738 = vunpack.c.h.b16 %v609
    %v739 = vunpack.c.l.b16 %v610
    %v740 = vunpack.c.h.b16 %v610
    %v741 = vunpack.c.l.b16 %v611
    %v742 = vunpack.c.h.b16 %v611
    %v743 = vunpack.c.l.b16 %v612
    %v744 = vunpack.c.h.b16 %v612
    %v745 = vunpack.c.l.b16 %v613
    %v746 = vunpack.c.h.b16 %v613
    %v747 = vunpack.c.l.b16 %v614
    %v748 = vunpack.c.h.b16 %v614
    %v749 = vunpack.c.l.b16 %v615
    %v750 = vunpack.c.h.b16 %v615
    %v751 = vunpack.c.l.b16 %v616
    %v752 = vunpack.c.h.b16 %v616
    %v753 = vunpack.c.l.b16 %v617
    %v754 = vunpack.c.h.b16 %v617
    %v755 = vunpack.c.l.b16 %v618
    %v756 = vunpack.c.h.b16 %v618
    %v757 = vunpack.c.l.b16 %v619
    %v758 = vunpack.c.h.b16 %v619
    %v759 = vunpack.c.l.b16 %v620
    %v760 = vunpack.c.h.b16 %v620
    %v761 = vunpack.c.l.b16 %v621
    %v762 = vunpack.c.h.b16 %v621
    %v763 = vunpack.c.l.b16 %v622
    %v764 = vunpack.c.h.b16 %v622
    %v765 = vunpack.c.l.b16 %v623
    %v766 = vunpack.c.h.b16 %v623
    %v767 = vunpack.c.l.b16 %v624
    %v768 = vunpack.c.h.b16 %v624
    %v769 = vunpack.c.l.b16 %v625
    %v770 = vunpack.c.h.b16 %v625
    %v771 = vunpack.c.l.b16 %v626
    %v772 = vunpack.c.h.b16 %v626
    %v773 = vunpack.c.l.b16 %v627
    %v774 = vunpack.c.h.b16 %v627
    %v775 = vunpack.c.l.b16 %v628
    %v776 = vunpack.c.h.b16 %v628
    %v777 = vunpack.c.l.b16 %v629
    %v778 = vunpack.c.h.b16 %v629
    %v779 = vunpack.c.l.b16 %v630
    %v780 = vunpack.c.h.b16 %v630
    %v781 = vunpack.c.l.b16 %v631
    %v782 = vunpack.c.h.b16 %v631
    %v783 = vunpack.c.l.b16 %v632
    %v784 = vunpack.c.h.b16 %v632
    %v785 = vunpack.c.l.b16 %v633
    %v786 = vunpack.c.h.b16 %v633
    %v787 = vunpack.c.l.b16 %v634
    %v788 = vunpack.c.h.b16 %v634
    %v789 = vunpack.c.l.b16 %v635
    %v790 = vunpack.c.h.b16 %v635
    %v791 = vunpack.c.l.b16 %v636
    %v792 = vunpack.c.h.b16 %v636
    %v793 = vunpack.c.l.b16 %v637
    %v794 = vunpack.c.h.b16 %v637
    %v795 = vunpack.c.l.b16 %v638
    %v796 = vunpack.c.h.b16 %v638
    %v797 = vunpack.c.l.b16 %v639
    %v798 = vunpack.c.h.b16 %v639
    %v799 = vunpack.c.l.b16 %v640
    %v800 = vunpack.c.h.b16 %v640
    %v801 = vunpack.c.l.b16 %v641
    %v802 = vunpack.c.h.b16 %v641
    %v803 = vunpack.c.l.b16 %v642
    %v804 = vunpack.c.h.b16 %v642
    %v805 = vunpack.c.l.b16 %v643
    %v806 = vunpack.c.h.b16 %v643
    %v807 = vunpack.c.l.b16 %v644
    %v808 = vunpack.c.h.b16 %v644
    %v809 = vunpack.c.l.b16 %v645
    %v810 = vunpack.c.h.b16 %v645
    %v811 = vunpack.c.l.b16 %v646
    %v812 = vunpack.c.h.b16 %v646
    %v813 = vunpack.c.l.b16 %v647
    %v814 = vunpack.c.h.b16 %v647
    %v815 = vunpack.c.l.b16 %v648
    %v816 = vunpack.c.h.b16 %v648
    %v817 = vunpack.c.l.b16 %v649
    %v818 = vunpack.c.h.b16 %v649
    %v819 = vunpack.c.l.b16 %v650
    %v820 = vunpack.c.h.b16 %v650
    %v821 = vunpack.c.l.b16 %v651
    %v822 = vunpack.c.h.b16 %v651
    %v823 = vunpack.c.l.b16 %v652
    %v824 = vunpack.c.h.b16 %v652
    %v825 = vunpack.c.l.b16 %v653
    %v826 = vunpack.c.h.b16 %v653
    %v827 = vunpack.c.l.b16 %v654
    %v828 = vunpack.c.h.b16 %v654
    %v829 = vunpack.c.l.b16 %v655
    %v830 = vunpack.c.h.b16 %v655
    %v831 = vunpack.c.l.b16 %v656
    %v832 = vunpack.c.h.b16 %v656
    %v833 = vunpack.c.l.b16 %v657
    %v834 = vunpack.c.h.b16 %v657
    %v835 = vunpack.c.l.b16 %v658
    %v836 = vunpack.c.h.b16 %v658
    %v837 = vunpack.c.l.b16 %v659
    %v838 = vunpack.c.h.b16 %v659
    %v839 = vunpack.c.l.b16 %v660
    %v840 = vunpack.c.h.b16 %v660
    %v841 = vunpack.c.l.b16 %v661
    %v842 = vunpack.c.h.b16 %v661
    %v843 = vunpack.c.l.b16 %v662
    %v844 = vunpack.c.h.b16 %v662
    %v845 = vunpack.c.l.b16 %v663
    %v846 = vunpack.c.h.b16 %v663
    %v847 = vunpack.c.l.b16 %v664
    %v848 = vunpack.c.h.b16 %v664
    %v849 = vunpack.c.l.b16 %v665
    %v850 = vunpack.c.h.b16 %v665
    %v851 = vunpack.c.l.b16 %v666
    %v852 = vunpack.c.h.b16 %v666
    %v853 = vunpack.c.l.b16 %v667
    %v854 = vunpack.c.h.b16 %v667
    %v855 = vunpack.c.l.b16 %v668
    %v856 = vunpack.c.h.b16 %v668
    %v857 = vunpack.c.l.b16 %v669
    %v858 = vunpack.c.h.b16 %v669
    %v859 = vunpack.c.l.b16 %v670
    %v860 = vunpack.c.h.b16 %v670
    %v861 = vunpack.c.l.b16 %v671
    %v862 = vunpack.c.h.b16 %v671
    %v863 = vunpack.c.l.b16 %v672
    %v864 = vunpack.c.h.b16 %v672
    %v865 = vpack.c.b16 %v745, %v737
    %v866 = vpack.c.b16 %v746, %v738
    %v867 = vpack.c.b16 %v747, %v739
    %v868 = vpack.c.b16 %v748, %v740
    %v869 = vpack.c.b16 %v749, %v741
    %v870 = vpack.c.b16 %v750, %v742
    %v871 = vpack.c.b16 %v751, %v743
    %v872 = vpack.c.b16 %v752, %v744
    %v873 = vpack.c.b16 %v761, %v753
    %v874 = vpack.c.b16 %v762, %v754
    %v875 = vpack.c.b16 %v763, %v755
    %v876 = vpack.c.b16 %v764, %v756
    %v877 = vpack.c.b16 %v765, %v757
    %v878 = vpack.c.b16 %v766, %v758
    %v879 = vpack.c.b16 %v767, %v759
    %v880 = vpack.c.b16 %v768, %v760
    %v881 = vpack.c.b16 %v777, %v769
    %v882 = vpack.c.b16 %v778, %v770
    %v883 = vpack.c.b16 %v779, %v771
    %v884 = vpack.c.b16 %v780, %v772
    %v885 = vpack.c.b16 %v781, %v773
    %v886 = vpack.c.b16 %v782, %v774
    %v887 = vpack.c.b16 %v783, %v775
    %v888 = vpack.c.b16 %v784, %v776
    %v889 = vpack.c.b16 %v793, %v785
    %v890 = vpack.c.b16 %v794, %v786
    %v891 = vpack.c.b16 %v795, %v787
    %v892 = vpack.c.b16 %v796, %v788
    %v893 = vpack.c.b16 %v797, %v789
    %v894 = vpack.c.b16 %v798, %v790
    %v895 = vpack.c.b16 %v799, %v791
    %v896 = vpack.c.b16 %v800, %v792
    %v897 = vpack.c.b16 %v809, %v801
    %v898 = vpack.c.b16 %v810, %v802
    %v899 = vpack.c.b16 %v811, %v803
    %v900 = vpack.c.b16 %v812, %v804
    %v901 = vpack.c.b16 %v813, %v805
    %v902 = vpack.c.b16 %v814, %v806
    %v903 = vpack.c.b16 %v815, %v807
    %v904 = vpack.c.b16 %v816, %v808
    %v905 = vpack.c.b16 %v825, %v817
    %v906 = vpack.c.b16 %v826, %v818
    %v907 = vpack.c.b16 %v827, %v819
    %v908 = vpack.c.b16 %v828, %v820
    %v909 = vpack.c.b16 %v829, %v821
    %v910 = vpack.c.b16 %v830, %v822
    %v911 = vpack.c.b16 %v831, %v823
    %v912 = vpack.c.b16 %v832, %v824
    %v913 = vpack.c.b16 %v841, %v833
    %v914 = vpack.c.b16 %v842, %v834
    %v915 = vpack.c.b16 %v843, %v835
    %v916 = vpack.c.b16 %v844, %v836
    %v917 = vpack.c.b16 %v845, %v837
    %v918 = vpack.c.b16 %v846, %v838
    %v919 = vpack.c.b16 %v847, %v839
    %v920 = vpack.c.b16 %v848, %v840
    %v921 = vpack.c.b16 %v857, %v849
    %v922 = vpack.c.b16 %v858, %v850
    %v923 = vpack.c.b16 %v859, %v851
    %v924 = vpack.c.b16 %v860, %v852
    %v925 = vpack.c.b16 %v861, %v853
    %v926 = vpack.c.b16 %v862, %v854
    %v927 = vpack.c.b16 %v863, %v855
    %v928 = vpack.c.b16 %v864, %v856
    %993 = vmatprep.subr.bf16.mxu0 %v922
    %994 = vmatpush1.bf16.msra.mxu0 %v921
    %995 = vmatprep.subr.bf16.mxu0 %v914
    %996 = vmatpush1.bf16.msra.mxu0 %v913
    %997 = vmatprep.subr.bf16.mxu0 %v906
    %998 = vmatpush1.bf16.msra.mxu0 %v905
    %999 = vmatprep.subr.bf16.mxu0 %v898
    %1000 = vmatpush1.bf16.msra.mxu0 %v897
    %1001 = vmatprep.subr.bf16.mxu0 %v890
    %1002 = vmatpush1.bf16.msra.mxu0 %v889
    %1003 = vmatprep.subr.bf16.mxu0 %v882
    %1004 = vmatpush1.bf16.msra.mxu0 %v881
    %1005 = vmatprep.subr.bf16.mxu0 %v874
    %1006 = vmatpush1.bf16.msra.mxu0 %v873
    %1007 = vmatprep.subr.bf16.mxu0 %v866
    %1008 = vmatpush1.bf16.msra.mxu0 %v865
    %1009 = vmatprep.subr.bf16.mxu0 0
    %1010 = vmatpush2.bf16.msra.mxu0 0
    %1011 = vmatprep.subr.bf16.mxu0 0
    %1012 = vmatpush2.bf16.msra.mxu0 0
    %1013 = vmatprep.subr.bf16.mxu0 0
    %1014 = vmatpush2.bf16.msra.mxu0 0
    %1015 = vmatprep.subr.bf16.mxu0 0
    %1016 = vmatpush2.bf16.msra.mxu0 0
    %1017 = vmatprep.subr.bf16.mxu0 0
    %1018 = vmatpush2.bf16.msra.mxu0 0
    %1019 = vmatprep.subr.bf16.mxu0 0
    %1020 = vmatpush2.bf16.msra.mxu0 0
    %1021 = vmatprep.subr.bf16.mxu0 0
    %1022 = vmatpush2.bf16.msra.mxu0 0
    %1023 = vmatprep.subr.bf16.mxu0 0
    %1024 = vmatpush2.bf16.msra.mxu0 0
    %1025 = vmatprep.mubr.bf16.mxu0 0
    %1026 = vmatmul.mubr.bf16.gmra.mxu0 %v440
    %v1027 = vpop.f32.mrf.mxu0
    %v1028 = vadd.f32 0.0, %v1027
    %v1029 = vpop.f32.mrf.mxu0
    %v1030 = vadd.f32 0.0, %v1029
    %v1031 = vpop.f32.mrf.mxu0
    %v1032 = vpop.f32.mrf.mxu0
    %1033 = vdwg.mxu0
    %1034 = vmatprep.subr.bf16.mxu0 %v924
    %1035 = vmatpush1.bf16.msra.mxu0 %v923
    %1036 = vmatprep.subr.bf16.mxu0 %v916
    %1037 = vmatpush1.bf16.msra.mxu0 %v915
    %1038 = vmatprep.subr.bf16.mxu0 %v908
    %1039 = vmatpush1.bf16.msra.mxu0 %v907
    %1040 = vmatprep.subr.bf16.mxu0 %v900
    %1041 = vmatpush1.bf16.msra.mxu0 %v899
    %1042 = vmatprep.subr.bf16.mxu0 %v892
    %1043 = vmatpush1.bf16.msra.mxu0 %v891
    %1044 = vmatprep.subr.bf16.mxu0 %v884
    %1045 = vmatpush1.bf16.msra.mxu0 %v883
    %1046 = vmatprep.subr.bf16.mxu0 %v876
    %1047 = vmatpush1.bf16.msra.mxu0 %v875
    %1048 = vmatprep.subr.bf16.mxu0 %v868
    %1049 = vmatpush1.bf16.msra.mxu0 %v867
    %1050 = vmatprep.subr.bf16.mxu0 0
    %1051 = vmatpush2.bf16.msra.mxu0 0
    %1052 = vmatprep.subr.bf16.mxu0 0
    %1053 = vmatpush2.bf16.msra.mxu0 0
    %1054 = vmatprep.subr.bf16.mxu0 0
    %1055 = vmatpush2.bf16.msra.mxu0 0
    %1056 = vmatprep.subr.bf16.mxu0 0
    %1057 = vmatpush2.bf16.msra.mxu0 0
    %1058 = vmatprep.subr.bf16.mxu0 0
    %1059 = vmatpush2.bf16.msra.mxu0 0
    %1060 = vmatprep.subr.bf16.mxu0 0
    %1061 = vmatpush2.bf16.msra.mxu0 0
    %1062 = vmatprep.subr.bf16.mxu0 0
    %1063 = vmatpush2.bf16.msra.mxu0 0
    %1064 = vmatprep.subr.bf16.mxu0 0
    %1065 = vmatpush2.bf16.msra.mxu0 0
    %1066 = vmatprep.mubr.bf16.mxu0 0
    %1067 = vmatmul.mubr.bf16.gmra.mxu0 %v440
    %v1068 = vpop.f32.mrf.mxu0
    %v1069 = vadd.f32 0.0, %v1068
    %v1070 = vpop.f32.mrf.mxu0
    %v1071 = vadd.f32 0.0, %v1070
    %v1072 = vpop.f32.mrf.mxu0
    %v1073 = vpop.f32.mrf.mxu0
    %1074 = vdwg.mxu0
    %1075 = vmatprep.subr.bf16.mxu0 %v926
    %1076 = vmatpush1.bf16.msra.mxu0 %v925
    %1077 = vmatprep.subr.bf16.mxu0 %v918
    %1078 = vmatpush1.bf16.msra.mxu0 %v917
    %1079 = vmatprep.subr.bf16.mxu0 %v910
    %1080 = vmatpush1.bf16.msra.mxu0 %v909
    %1081 = vmatprep.subr.bf16.mxu0 %v902
    %1082 = vmatpush1.bf16.msra.mxu0 %v901
    %1083 = vmatprep.subr.bf16.mxu0 %v894
    %1084 = vmatpush1.bf16.msra.mxu0 %v893
    %1085 = vmatprep.subr.bf16.mxu0 %v886
    %1086 = vmatpush1.bf16.msra.mxu0 %v885
    %1087 = vmatprep.subr.bf16.mxu0 %v878
    %1088 = vmatpush1.bf16.msra.mxu0 %v877
    %1089 = vmatprep.subr.bf16.mxu0 %v870
    %1090 = vmatpush1.bf16.msra.mxu0 %v869
    %1091 = vmatprep.subr.bf16.mxu0 0
    %1092 = vmatpush2.bf16.msra.mxu0 0
    %1093 = vmatprep.subr.bf16.mxu0 0
    %1094 = vmatpush2.bf16.msra.mxu0 0
    %1095 = vmatprep.subr.bf16.mxu0 0
    %1096 = vmatpush2.bf16.msra.mxu0 0
    %1097 = vmatprep.subr.bf16.mxu0 0
    %1098 = vmatpush2.bf16.msra.mxu0 0
    %1099 = vmatprep.subr.bf16.mxu0 0
    %1100 = vmatpush2.bf16.msra.mxu0 0
    %1101 = vmatprep.subr.bf16.mxu0 0
    %1102 = vmatpush2.bf16.msra.mxu0 0
    %1103 = vmatprep.subr.bf16.mxu0 0
    %1104 = vmatpush2.bf16.msra.mxu0 0
    %1105 = vmatprep.subr.bf16.mxu0 0
    %1106 = vmatpush2.bf16.msra.mxu0 0
    %1107 = vmatprep.mubr.bf16.mxu0 0
    %1108 = vmatmul.mubr.bf16.gmra.mxu0 %v440
    %v1109 = vpop.f32.mrf.mxu0
    %v1110 = vadd.f32 0.0, %v1109
    %v1111 = vpop.f32.mrf.mxu0
    %v1112 = vadd.f32 0.0, %v1111
    %v1113 = vpop.f32.mrf.mxu0
    %v1114 = vpop.f32.mrf.mxu0
    %1115 = vdwg.mxu0
    %1116 = vmatprep.subr.bf16.mxu0 %v928
    %1117 = vmatpush1.bf16.msra.mxu0 %v927
    %1118 = vmatprep.subr.bf16.mxu0 %v920
    %1119 = vmatpush1.bf16.msra.mxu0 %v919
    %1120 = vmatprep.subr.bf16.mxu0 %v912
    %1121 = vmatpush1.bf16.msra.mxu0 %v911
    %1122 = vmatprep.subr.bf16.mxu0 %v904
    %1123 = vmatpush1.bf16.msra.mxu0 %v903
    %1124 = vmatprep.subr.bf16.mxu0 %v896
    %1125 = vmatpush1.bf16.msra.mxu0 %v895
    %1126 = vmatprep.subr.bf16.mxu0 %v888
    %1127 = vmatpush1.bf16.msra.mxu0 %v887
    %1128 = vmatprep.subr.bf16.mxu0 %v880
    %1129 = vmatpush1.bf16.msra.mxu0 %v879
    %1130 = vmatprep.subr.bf16.mxu0 %v872
    %1131 = vmatpush1.bf16.msra.mxu0 %v871
    %1132 = vmatprep.subr.bf16.mxu0 0
    %1133 = vmatpush2.bf16.msra.mxu0 0
    %1134 = vmatprep.subr.bf16.mxu0 0
    %1135 = vmatpush2.bf16.msra.mxu0 0
    %1136 = vmatprep.subr.bf16.mxu0 0
    %1137 = vmatpush2.bf16.msra.mxu0 0
    %1138 = vmatprep.subr.bf16.mxu0 0
    %1139 = vmatpush2.bf16.msra.mxu0 0
    %1140 = vmatprep.subr.bf16.mxu0 0
    %1141 = vmatpush2.bf16.msra.mxu0 0
    %1142 = vmatprep.subr.bf16.mxu0 0
    %1143 = vmatpush2.bf16.msra.mxu0 0
    %1144 = vmatprep.subr.bf16.mxu0 0
    %1145 = vmatpush2.bf16.msra.mxu0 0
    %1146 = vmatprep.subr.bf16.mxu0 0
    %1147 = vmatpush2.bf16.msra.mxu0 0
    %1148 = vmatprep.mubr.bf16.mxu0 0
    %1149 = vmatmul.mubr.bf16.gmra.mxu0 %v440
    %v1150 = vpop.f32.mrf.mxu0
    %v1151 = vadd.f32 0.0, %v1150
    %v1152 = vpop.f32.mrf.mxu0
    %v1153 = vadd.f32 0.0, %v1152
    %v1154 = vpop.f32.mrf.mxu0
    %v1155 = vpop.f32.mrf.mxu0
    %1156 = vdwg.mxu0
    %v1157 = vcombine.low %v1028, %v1069
    %v1158 = vcombine.high %v1028, %v1069
    %v1160 = vunpack.c.l.s4 1983009808
    %v1161 = vunpack.c.0.s8 %v1160
    %v1162 = vlaneseq
    %v1163 = vshrl.u32 %v1162, 7
    %v1164 = vsub.s32 %v1161, %v1163
    %v1165 = vrot.slane %v1157, %v1164
    %v1167 = vunpack.c.l.s4 1983009808
    %v1168 = vunpack.c.0.s8 %v1167
    %v1169 = vlaneseq
    %v1170 = vshrl.u32 %v1169, 7
    %v1171 = vsub.s32 %v1168, %v1170
    %v1172 = vrot.slane %v1158, %v1171
    %v1173 = vcombine.low %v1030, %v1071
    %v1174 = vcombine.high %v1030, %v1071
    %v1176 = vunpack.c.l.s4 1983009808
    %v1177 = vunpack.c.0.s8 %v1176
    %v1178 = vlaneseq
    %v1179 = vshrl.u32 %v1178, 7
    %v1180 = vsub.s32 %v1177, %v1179
    %v1181 = vrot.slane %v1173, %v1180
    %v1183 = vunpack.c.l.s4 1983009808
    %v1184 = vunpack.c.0.s8 %v1183
    %v1185 = vlaneseq
    %v1186 = vshrl.u32 %v1185, 7
    %v1187 = vsub.s32 %v1184, %v1186
    %v1188 = vrot.slane %v1174, %v1187
    %v1189 = vcombine.low %v1110, %v1151
    %v1190 = vcombine.high %v1110, %v1151
    %v1192 = vunpack.c.l.s4 1983009808
    %v1193 = vunpack.c.0.s8 %v1192
    %v1194 = vlaneseq
    %v1195 = vshrl.u32 %v1194, 7
    %v1196 = vsub.s32 %v1193, %v1195
    %v1197 = vrot.slane %v1189, %v1196
    %v1199 = vunpack.c.l.s4 1983009808
    %v1200 = vunpack.c.0.s8 %v1199
    %v1201 = vlaneseq
    %v1202 = vshrl.u32 %v1201, 7
    %v1203 = vsub.s32 %v1200, %v1202
    %v1204 = vrot.slane %v1190, %v1203
    %v1205 = vcombine.low %v1112, %v1153
    %v1206 = vcombine.high %v1112, %v1153
    %v1208 = vunpack.c.l.s4 1983009808
    %v1209 = vunpack.c.0.s8 %v1208
    %v1210 = vlaneseq
    %v1211 = vshrl.u32 %v1210, 7
    %v1212 = vsub.s32 %v1209, %v1211
    %v1213 = vrot.slane %v1205, %v1212
    %v1215 = vunpack.c.l.s4 1983009808
    %v1216 = vunpack.c.0.s8 %v1215
    %v1217 = vlaneseq
    %v1218 = vshrl.u32 %v1217, 7
    %v1219 = vsub.s32 %v1216, %v1218
    %v1220 = vrot.slane %v1206, %v1219
    %v1221 = vcombine.low %v1165, %v1181
    %v1222 = vcombine.high %v1165, %v1181
    %v1224 = vunpack.c.l.s4 1934713408
    %v1225 = vunpack.c.0.s8 %v1224
    %v1226 = vlaneseq
    %v1227 = vshrl.u32 %v1226, 7
    %v1228 = vsub.s32 %v1225, %v1227
    %v1229 = vrot.slane %v1221, %v1228
    %v1231 = vunpack.c.l.s4 1934713408
    %v1232 = vunpack.c.0.s8 %v1231
    %v1233 = vlaneseq
    %v1234 = vshrl.u32 %v1233, 7
    %v1235 = vsub.s32 %v1232, %v1234
    %v1236 = vrot.slane %v1222, %v1235
    %v1237 = vcombine.low %v1172, %v1188
    %v1238 = vcombine.high %v1172, %v1188
    %v1240 = vunpack.c.l.s4 1934713408
    %v1241 = vunpack.c.0.s8 %v1240
    %v1242 = vlaneseq
    %v1243 = vshrl.u32 %v1242, 7
    %v1244 = vsub.s32 %v1241, %v1243
    %v1245 = vrot.slane %v1237, %v1244
    %v1247 = vunpack.c.l.s4 1934713408
    %v1248 = vunpack.c.0.s8 %v1247
    %v1249 = vlaneseq
    %v1250 = vshrl.u32 %v1249, 7
    %v1251 = vsub.s32 %v1248, %v1250
    %v1252 = vrot.slane %v1238, %v1251
    %v1253 = vcombine.low %v1197, %v1213
    %v1254 = vcombine.high %v1197, %v1213
    %v1256 = vunpack.c.l.s4 1934713408
    %v1257 = vunpack.c.0.s8 %v1256
    %v1258 = vlaneseq
    %v1259 = vshrl.u32 %v1258, 7
    %v1260 = vsub.s32 %v1257, %v1259
    %v1261 = vrot.slane %v1253, %v1260
    %v1263 = vunpack.c.l.s4 1934713408
    %v1264 = vunpack.c.0.s8 %v1263
    %v1265 = vlaneseq
    %v1266 = vshrl.u32 %v1265, 7
    %v1267 = vsub.s32 %v1264, %v1266
    %v1268 = vrot.slane %v1254, %v1267
    %v1269 = vcombine.low %v1204, %v1220
    %v1270 = vcombine.high %v1204, %v1220
    %v1272 = vunpack.c.l.s4 1934713408
    %v1273 = vunpack.c.0.s8 %v1272
    %v1274 = vlaneseq
    %v1275 = vshrl.u32 %v1274, 7
    %v1276 = vsub.s32 %v1273, %v1275
    %v1277 = vrot.slane %v1269, %v1276
    %v1279 = vunpack.c.l.s4 1934713408
    %v1280 = vunpack.c.0.s8 %v1279
    %v1281 = vlaneseq
    %v1282 = vshrl.u32 %v1281, 7
    %v1283 = vsub.s32 %v1280, %v1282
    %v1284 = vrot.slane %v1270, %v1283
    %v1285 = vcombine.low %v1229, %v1261
    %v1286 = vcombine.high %v1229, %v1261
    %v1287 = vcombine.low %v1236, %v1268
    %v1288 = vcombine.high %v1236, %v1268
    %v1289 = vcombine.low %v1245, %v1277
    %v1290 = vcombine.high %v1245, %v1277
    %v1291 = vcombine.low %v1252, %v1284
    %v1292 = vcombine.high %v1252, %v1284
    %v1294 = vcombine.high %v251, %v251
    %v1296 = vunpack.c.l.s4 1966171168
    %v1297 = vunpack.c.0.s8 %v1296
    %v1298 = vlaneseq
    %v1299 = vshrl.u32 %v1298, 7
    %v1300 = vsub.s32 %v1297, %v1299
    %v1301 = vrot.slane %v251, %v1300
    %v1303 = vunpack.c.l.s4 1966171168
    %v1304 = vunpack.c.0.s8 %v1303
    %v1305 = vlaneseq
    %v1306 = vshrl.u32 %v1305, 7
    %v1307 = vsub.s32 %v1304, %v1306
    %v1308 = vrot.slane %v1294, %v1307
    %v1309 = vcombine.high %v1301, %v1301
    %v1310 = vcombine.high %v1308, %v1308
    %v1312 = vunpack.c.l.s4 1966171168
    %v1313 = vunpack.c.0.s8 %v1312
    %v1314 = vlaneseq
    %v1315 = vshrl.u32 %v1314, 7
    %v1316 = vsub.s32 %v1313, %v1315
    %v1317 = vrot.slane %v1301, %v1316
    %v1319 = vunpack.c.l.s4 1966171168
    %v1320 = vunpack.c.0.s8 %v1319
    %v1321 = vlaneseq
    %v1322 = vshrl.u32 %v1321, 7
    %v1323 = vsub.s32 %v1320, %v1322
    %v1324 = vrot.slane %v1308, %v1323
    %v1326 = vunpack.c.l.s4 1966171168
    %v1327 = vunpack.c.0.s8 %v1326
    %v1328 = vlaneseq
    %v1329 = vshrl.u32 %v1328, 7
    %v1330 = vsub.s32 %v1327, %v1329
    %v1331 = vrot.slane %v1309, %v1330
    %v1333 = vunpack.c.l.s4 1966171168
    %v1334 = vunpack.c.0.s8 %v1333
    %v1335 = vlaneseq
    %v1336 = vshrl.u32 %v1335, 7
    %v1337 = vsub.s32 %v1334, %v1336
    %v1338 = vrot.slane %v1310, %v1337
    %v1339 = vcombine.high %v1317, %v1317
    %v1340 = vcombine.high %v1324, %v1324
    %v1341 = vcombine.high %v1331, %v1331
    %v1342 = vcombine.high %v1338, %v1338
    %v1343 = vlaneseq
    %v1344 = vshrl.u32 %v1343, 7
    %v1345 = vsub.s32 0, %v1344
    %v1346 = vrot.slane %v1317, %v1345
    %v1347 = vlaneseq
    %v1348 = vshrl.u32 %v1347, 7
    %v1349 = vsub.s32 0, %v1348
    %v1350 = vrot.slane %v1331, %v1349
    %v1351 = vlaneseq
    %v1352 = vshrl.u32 %v1351, 7
    %v1353 = vsub.s32 0, %v1352
    %v1354 = vrot.slane %v1339, %v1353
    %v1355 = vlaneseq
    %v1356 = vshrl.u32 %v1355, 7
    %v1357 = vsub.s32 0, %v1356
    %v1358 = vrot.slane %v1341, %v1357
    %v1359 = vlaneseq
    %v1360 = vshrl.u32 %v1359, 7
    %v1361 = vsub.s32 0, %v1360
    %v1362 = vrot.slane %v1324, %v1361
    %v1363 = vlaneseq
    %v1364 = vshrl.u32 %v1363, 7
    %v1365 = vsub.s32 0, %v1364
    %v1366 = vrot.slane %v1338, %v1365
    %v1367 = vlaneseq
    %v1368 = vshrl.u32 %v1367, 7
    %v1369 = vsub.s32 0, %v1368
    %v1370 = vrot.slane %v1340, %v1369
    %v1371 = vlaneseq
    %v1372 = vshrl.u32 %v1371, 7
    %v1373 = vsub.s32 0, %v1372
    %v1374 = vrot.slane %v1342, %v1373
    %v1383 = vmul.f32 %v1285, %v1346
    %v1384 = vmul.f32 %v1286, %v1350
    %v1385 = vmul.f32 %v1287, %v1354
    %v1386 = vmul.f32 %v1288, %v1358
    %v1387 = vmul.f32 %v1289, %v1362
    %v1388 = vmul.f32 %v1290, %v1366
    %v1389 = vmul.f32 %v1291, %v1370
    %v1390 = vmul.f32 %v1292, %v1374
    %1391 = vadd.xlane.f32.xlu0 %v1383
    %v1392 = vpop.xlane.xlu0 %1391
    %1393 = vadd.xlane.f32.xlu0 %v1384
    %v1394 = vpop.xlane.xlu0 %1393
    %1395 = vadd.xlane.f32.xlu0 %v1385
    %v1396 = vpop.xlane.xlu0 %1395
    %1397 = vadd.xlane.f32.xlu0 %v1386
    %v1398 = vpop.xlane.xlu0 %1397
    %1399 = vadd.xlane.f32.xlu0 %v1387
    %v1400 = vpop.xlane.xlu0 %1399
    %1401 = vadd.xlane.f32.xlu0 %v1388
    %v1402 = vpop.xlane.xlu0 %1401
    %1403 = vadd.xlane.f32.xlu0 %v1389
    %v1404 = vpop.xlane.xlu0 %1403
    %1405 = vadd.xlane.f32.xlu0 %v1390
    %v1406 = vpop.xlane.xlu0 %1405
    %v1408 = vlaneseq
    %v1409 = vshrl.u32 %v1408, 7
    %v1410 = vsub.s32 0, %v1409
    %v1411 = vrot.slane %v604, %v1410
    %1413 = vbcast.lane.b32.xlu0 %v1411, 256
    %v1414 = vpop.permute.xlu0 %1413
    %v1415 = vlaneseq
    %v1416 = vshrl.u32 %v1415, 7
    %v1417 = vsub.s32 1, %v1416
    %v1418 = vrot.slane %v604, %v1417
    %1420 = vbcast.lane.b32.xlu0 %v1418, 256
    %v1421 = vpop.permute.xlu0 %1420
    %v1422 = vlaneseq
    %v1423 = vshrl.u32 %v1422, 7
    %v1424 = vsub.s32 2, %v1423
    %v1425 = vrot.slane %v604, %v1424
    %1427 = vbcast.lane.b32.xlu0 %v1425, 256
    %v1428 = vpop.permute.xlu0 %1427
    %v1429 = vlaneseq
    %v1430 = vshrl.u32 %v1429, 7
    %v1431 = vsub.s32 3, %v1430
    %v1432 = vrot.slane %v604, %v1431
    %1434 = vbcast.lane.b32.xlu0 %v1432, 256
    %v1435 = vpop.permute.xlu0 %1434
    %v1436 = vlaneseq
    %v1437 = vshrl.u32 %v1436, 7
    %v1438 = vsub.s32 4, %v1437
    %v1439 = vrot.slane %v604, %v1438
    %1441 = vbcast.lane.b32.xlu0 %v1439, 256
    %v1442 = vpop.permute.xlu0 %1441
    %v1443 = vlaneseq
    %v1444 = vshrl.u32 %v1443, 7
    %v1445 = vsub.s32 5, %v1444
    %v1446 = vrot.slane %v604, %v1445
    %1448 = vbcast.lane.b32.xlu0 %v1446, 256
    %v1449 = vpop.permute.xlu0 %1448
    %v1450 = vlaneseq
    %v1451 = vshrl.u32 %v1450, 7
    %v1452 = vsub.s32 6, %v1451
    %v1453 = vrot.slane %v604, %v1452
    %1455 = vbcast.lane.b32.xlu0 %v1453, 256
    %v1456 = vpop.permute.xlu0 %1455
    %v1457 = vlaneseq
    %v1458 = vshrl.u32 %v1457, 7
    %v1459 = vsub.s32 7, %v1458
    %v1460 = vrot.slane %v604, %v1459
    %1462 = vbcast.lane.b32.xlu0 %v1460, 256
    %v1463 = vpop.permute.xlu0 %1462
    %v1472 = vadd.f32 %v1392, %v1414
    %v1473 = vadd.f32 %v1394, %v1421
    %v1474 = vadd.f32 %v1396, %v1428
    %v1475 = vadd.f32 %v1398, %v1435
    %v1476 = vadd.f32 %v1400, %v1442
    %v1477 = vadd.f32 %v1402, %v1449
    %v1478 = vadd.f32 %v1404, %v1456
    %v1479 = vadd.f32 %v1406, %v1463
    %v1480 = vld [vmem:[%s8] sm:$0x1]
    %v1482 = vlaneseq
    %v1483 = vshrl.u32 %v1482, 7
    %v1484 = vsub.s32 0, %v1483
    %v1485 = vrot.slane %v1480, %v1484
    %1487 = vbcast.lane.b32.xlu0 %v1485, 256
    %v1488 = vpop.permute.xlu0 %1487
    %v1490 = vadd.f32 %v1472, %v1488
    %v1491 = vadd.f32 %v1473, %v1488
    %v1492 = vadd.f32 %v1474, %v1488
    %v1493 = vadd.f32 %v1475, %v1488
    %v1494 = vadd.f32 %v1476, %v1488
    %v1495 = vadd.f32 %v1477, %v1488
    %v1496 = vadd.f32 %v1478, %v1488
    %v1497 = vadd.f32 %v1479, %v1488
    %1506 = vset.pattern.permute.xlu0 0
    %1507 = vperm.xlu0 %1506, %v1490
    %v1508 = vpop.permute.xlu0 %1507
    %1509 = vset.pattern.permute.xlu0 0
    %1510 = vperm.xlu0 %1509, %v1491
    %v1511 = vpop.permute.xlu0 %1510
    %1512 = vset.pattern.permute.xlu0 0
    %1513 = vperm.xlu0 %1512, %v1492
    %v1514 = vpop.permute.xlu0 %1513
    %1515 = vset.pattern.permute.xlu0 0
    %1516 = vperm.xlu0 %1515, %v1493
    %v1517 = vpop.permute.xlu0 %1516
    %1518 = vset.pattern.permute.xlu0 0
    %1519 = vperm.xlu0 %1518, %v1494
    %v1520 = vpop.permute.xlu0 %1519
    %1521 = vset.pattern.permute.xlu0 0
    %1522 = vperm.xlu0 %1521, %v1495
    %v1523 = vpop.permute.xlu0 %1522
    %1524 = vset.pattern.permute.xlu0 0
    %1525 = vperm.xlu0 %1524, %v1496
    %v1526 = vpop.permute.xlu0 %1525
    %1527 = vset.pattern.permute.xlu0 0
    %1528 = vperm.xlu0 %1527, %v1497
    %v1529 = vpop.permute.xlu0 %1528
    %v1530 = vlaneseq
    %v1531 = vand.u32 %v1530, 127
    %v1532 = vlaneseq
    %v1533 = vshrl.u32 %v1532, 7
    %v1534 = vsub.s32 %v1531, %v1533
    %v1535 = vrot.slane %v1508, %v1534
    %v1536 = vlaneseq
    %v1537 = vshrl.u32 %v1536, 7
    %v1538 = vsub.s32 %v1531, %v1537
    %v1539 = vrot.slane %v1511, %v1538
    %v1540 = vlaneseq
    %v1541 = vshrl.u32 %v1540, 7
    %v1542 = vsub.s32 %v1531, %v1541
    %v1543 = vrot.slane %v1514, %v1542
    %v1544 = vlaneseq
    %v1545 = vshrl.u32 %v1544, 7
    %v1546 = vsub.s32 %v1531, %v1545
    %v1547 = vrot.slane %v1517, %v1546
    %v1548 = vlaneseq
    %v1549 = vshrl.u32 %v1548, 7
    %v1550 = vsub.s32 %v1531, %v1549
    %v1551 = vrot.slane %v1520, %v1550
    %v1552 = vlaneseq
    %v1553 = vshrl.u32 %v1552, 7
    %v1554 = vsub.s32 %v1531, %v1553
    %v1555 = vrot.slane %v1523, %v1554
    %v1556 = vlaneseq
    %v1557 = vshrl.u32 %v1556, 7
    %v1558 = vsub.s32 %v1531, %v1557
    %v1559 = vrot.slane %v1526, %v1558
    %v1560 = vlaneseq
    %v1561 = vshrl.u32 %v1560, 7
    %v1562 = vsub.s32 %v1531, %v1561
    %v1563 = vrot.slane %v1529, %v1562
    %vm1564 = vcmask 1041409
    %v1565 = vsel %vm1564, %v1539, %v1535
    %vm1566 = vcmask 1042434
    %v1567 = vsel %vm1566, %v1543, %v1565
    %vm1568 = vcmask 1043459
    %v1569 = vsel %vm1568, %v1547, %v1567
    %vm1570 = vcmask 1044484
    %v1571 = vsel %vm1570, %v1551, %v1569
    %vm1572 = vcmask 1045509
    %v1573 = vsel %vm1572, %v1555, %v1571
    %vm1574 = vcmask 1046534
    %v1575 = vsel %vm1574, %v1559, %v1573
    %vm1576 = vcmask 1047559
    %v1577 = vsel %vm1576, %v1563, %v1575
    %vm1579 = vcmask 64512
    %1580 = vst.msk [vmem:[#allocation8] sm:$0xff] %vm1579, %v1577
    // Predicated region
    $region50: #{tpu_custom_call.1} parent=1 // pred_check
      _
    $region51: #{tpu_custom_call.1} parent=1 // pred_check_branch
      %1582 = sbr.rel (0) target = $region53
    $region52: #{tpu_custom_call.1} parent=1 // pred_region
      %s1584 = ssub.s32 128, 128
      %1585 = vsyncadd [#allocation4], %s1584
      %s1587 = sshll.u32 [#allocation8], 4
      %s1588 = int_to_ptr.vmem [resolvable:$true] %s1587
      %1590 = dma.vmem_to_hbm [thread:$0]  %s1588, 128, %s9, [#allocation4]
    $region53: #{tpu_custom_call.1} parent=1 // pred_fallthru
      _
    // Predicated region
    $region54: #{tpu_custom_call.1} parent=1 // pred_check
      _
    $region55: #{tpu_custom_call.1} parent=1 // pred_check_branch
      %1592 = sbr.rel (0) target = $region57
    $region56: #{tpu_custom_call.1} parent=1 // pred_region
      %1593 = dma.done [#allocation4], 128
    $region57: #{tpu_custom_call.1} parent=1 // pred_fallthru
      _
    %1594 = vsyncpa [#allocation3], 1
    %1595 = vsyncpa [#allocation6], 1
    %1596 = vsyncpa [#allocation4], 1

</llo_original>
